<compile_context>
chip_gen: v7x
topology: tpu7x:2x2x1
jax: 0.10.0
libtpu: 0.0.40
codegen_flags: <defaults>
</compile_context>

<pallas_src>
import functools
import math

import jax
import jax.numpy as jnp
from jax import lax
from jax.experimental import pallas as pl
from jax.experimental.pallas import tpu as pltpu

_LANES = 128
_TARGET_BLOCK_BYTES = 2 * 1024 * 1024  # ~2 MiB x-blocks: >=85% of HBM roofline


def _round_up(a, b):
    return ((a + b - 1) // b) * b


def _round_down(a, b):
    return (a // b) * b


@functools.lru_cache(maxsize=None)
def _vmem_capacity_bytes():
    try:
        cap = int(getattr(pltpu.get_tpu_info(), "vmem_capacity_bytes", 0))
        if cap > 0:
            return cap
    except Exception:
        pass
    return 64 * 1024 * 1024  # conservative default = v7x per-core VMEM


def _vmem_limit_bytes():
    # Leave headroom below physical VMEM (64 MiB v7x, 128 MiB v5e/v6e).
    return int(min(_vmem_capacity_bytes() * 3 // 4, 96 * 1024 * 1024))


def _compiler_params(num_grid_dims):
    return pltpu.CompilerParams(
        dimension_semantics=("parallel",) * num_grid_dims,
        vmem_limit_bytes=_vmem_limit_bytes(),
    )


def _pick_rows(M, row_vmem_bytes):
    """Row-tile for an (M, row) layout: ~_TARGET_BLOCK_BYTES per block."""
    tm = max(1, _TARGET_BLOCK_BYTES // max(row_vmem_bytes, 1))
    if tm >= M:
        return M                      # single full block (equal-to-dim is legal)
    tm = max(16, _round_down(tm, 16))  # multiple of 16: safe for f32 and bf16
    return min(tm, M)


# ---------------------------------------------------------------------------
# channels_last, general path: block (tm, C), reduce over lanes.
# ---------------------------------------------------------------------------
def _ln_cl_kernel(x_ref, w_ref, b_ref, o_ref, *, eps):
    x = x_ref[...].astype(jnp.float32)               # (tm, C)
    w = w_ref[...].astype(jnp.float32)                # (1, C)
    b = b_ref[...].astype(jnp.float32)
    u = jnp.mean(x, axis=-1, keepdims=True)            # cross-lane reduce (XLU)
    xc = x - u
    s = jnp.mean(xc * xc, axis=-1, keepdims=True)      # biased variance
    inv = lax.rsqrt(s + eps)                            # EUP
    o_ref[...] = (xc * inv * w + b).astype(o_ref.dtype)


# ---------------------------------------------------------------------------
# channels_last, small-C lane-dense path: G=128//C rows folded into the lane
# axis; per-row (segmented) reductions via a block-diagonal matmul on the MXU.
# ---------------------------------------------------------------------------
def _ln_cl_folded_kernel(x_ref, s_ref, w_ref, b_ref, o_ref, *, eps, c):
    x = x_ref[...].astype(jnp.float32)                 # (tm, GC)
    S = s_ref[...]                                      # (GC, GC) block-diag of ones
    w = w_ref[...].astype(jnp.float32)                  # (1, GC), weight tiled G times
    b = b_ref[...].astype(jnp.float32)
    inv_c = 1.0 / c
    # Segmented sums broadcast back to every lane of the segment (f32-exact).
    u = jnp.dot(x, S, precision=jax.lax.Precision.HIGHEST,
                preferred_element_type=jnp.float32) * inv_c
    xc = x - u
    var = jnp.dot(xc * xc, S, precision=jax.lax.Precision.HIGHEST,
                  preferred_element_type=jnp.float32) * inv_c
    inv = lax.rsqrt(var + eps)                           # EUP
    o_ref[...] = (xc * inv * w + b).astype(o_ref.dtype)  # full 128-lane stores


def layernorm_channels_last(x, weight, bias, eps=1e-6):
    """x: (..., C); weight, bias: (C,). Output keeps x.dtype."""
    C = x.shape[-1]
    lead = x.shape[:-1]
    M = int(math.prod(lead)) if lead else 1
    itemsize = max(jnp.dtype(x.dtype).itemsize, 4)      # budget f32 temporaries

    x2 = x.reshape(M, C)                                 # metadata-only reshape
    w2 = weight.reshape(1, C)
    b2 = bias.reshape(1, C)

    # Lane-dense folded path for tiny C.
    fold = 0
    if C <= 64 and _LANES % C == 0:
        g = _LANES // C
        if g > 1 and M % g == 0:
            fold = g

    if fold:
        G = fold
        GC = G * C
        Mg = M // G
        xf = x2.reshape(Mg, GC)                          # still metadata-only
        wt = jnp.tile(w2, (1, G))                        # (1, GC): w[j % C]
        bt = jnp.tile(b2, (1, G))
        seg = jnp.arange(GC, dtype=jnp.int32) // C
        S = (seg[:, None] == seg[None, :]).astype(jnp.float32)   # (GC, GC)
        tm = _pick_rows(Mg, GC * itemsize)
        grid = (pl.cdiv(Mg, tm),)
        out = pl.pallas_call(
            functools.partial(_ln_cl_folded_kernel, eps=eps, c=C),
            out_shape=jax.ShapeDtypeStruct((Mg, GC), x.dtype),
            grid=grid,
            in_specs=[
                pl.BlockSpec((tm, GC), lambda i: (i, 0)),
                pl.BlockSpec((GC, GC), lambda i: (0, 0)),   # resident
                pl.BlockSpec((1, GC), lambda i: (0, 0)),    # resident
                pl.BlockSpec((1, GC), lambda i: (0, 0)),    # resident
            ],
            out_specs=pl.BlockSpec((tm, GC), lambda i: (i, 0)),
            compiler_params=_compiler_params(1),
        )(xf, S, wt, bt)
        return out.reshape(x.shape)

    # General path (C large enough to be lane-dense on its own).
    row_vmem = _round_up(C, _LANES) * itemsize           # VMEM pads lanes to 128
    tm = _pick_rows(M, row_vmem)
    grid = (pl.cdiv(M, tm),)
    out = pl.pallas_call(
        functools.partial(_ln_cl_kernel, eps=eps),
        out_shape=jax.ShapeDtypeStruct((M, C), x.dtype),
        grid=grid,
        in_specs=[
            pl.BlockSpec((tm, C), lambda i: (i, 0)),
            pl.BlockSpec((1, C), lambda i: (0, 0)),
            pl.BlockSpec((1, C), lambda i: (0, 0)),
        ],
        out_specs=pl.BlockSpec((tm, C), lambda i: (i, 0)),
        compiler_params=_compiler_params(1),
    )(x2, w2, b2)
    return out.reshape(x.shape)


# ---------------------------------------------------------------------------
# channels_first: x (B, C, H*W); normalize over C (sublane axis).
# ---------------------------------------------------------------------------
def _ln_cf_kernel(x_ref, w_ref, b_ref, o_ref, *, eps):
    w = w_ref[...].astype(jnp.float32)                   # (C, 1)
    b = b_ref[...].astype(jnp.float32)
    for bi in range(x_ref.shape[0]):                      # small, static unroll
        x = x_ref[bi].astype(jnp.float32)                 # (C, hw_t)
        u = jnp.mean(x, axis=0, keepdims=True)             # sublane reduce (XLU)
        xc = x - u
        s = jnp.mean(xc * xc, axis=0, keepdims=True)
        inv = lax.rsqrt(s + eps)                            # EUP
        o_ref[bi] = (w * (xc * inv) + b).astype(o_ref.dtype)


def layernorm_channels_first(x, weight, bias, eps=1e-6):
    """x: (B, C, H, W); weight, bias: (C,). Output keeps x.dtype."""
    B, C, H, W = x.shape
    HW = H * W
    itemsize = max(jnp.dtype(x.dtype).itemsize, 4)
    x2 = x.reshape(B, C, HW)                              # metadata-only reshape
    w2 = weight.reshape(C, 1)
    b2 = bias.reshape(C, 1)

    c_pad = _round_up(C, 8)                               # VMEM sublane padding
    # Lane tile: full HW when it fits the per-block target, else a multiple
    # of 128 (partial trailing block handled by Pallas masking).
    max_lane = max(1, _TARGET_BLOCK_BYTES // (c_pad * itemsize))
    if HW <= max_lane or HW <= _LANES:
        hw_t = HW
    else:
        hw_t = max(_LANES, _round_down(min(max_lane, HW), _LANES))
    hw_pad = _round_up(hw_t, _LANES)

    # Batches per grid step (statically unrolled inside the kernel body).
    bt = max(1, _TARGET_BLOCK_BYTES // (c_pad * hw_pad * itemsize))
    bt = min(bt, B, 8)
    # Keep >= 2 grid steps when possible so both v7x TensorCores get work.
    if pl.cdiv(B, bt) * pl.cdiv(HW, hw_t) < 2 and B > 1:
        bt = max(1, B // 2)
    grid = (pl.cdiv(B, bt), pl.cdiv(HW, hw_t))

    out = pl.pallas_call(
        functools.partial(_ln_cf_kernel, eps=eps),
        out_shape=jax.ShapeDtypeStruct((B, C, HW), x.dtype),
        grid=grid,
        in_specs=[
            pl.BlockSpec((bt, C, hw_t), lambda i, j: (i, 0, j)),
            pl.BlockSpec((C, 1), lambda i, j: (0, 0)),     # resident
            pl.BlockSpec((C, 1), lambda i, j: (0, 0)),     # resident
        ],
        out_specs=pl.BlockSpec((bt, C, hw_t), lambda i, j: (i, 0, j)),
        compiler_params=_compiler_params(2),
    )(x2, w2, b2)
    return out.reshape(B, C, H, W)


# ---------------------------------------------------------------------------
# Module-equivalent wrapper
# ---------------------------------------------------------------------------
def layer_norm(x, weight, bias, eps=1e-6, data_format="channels_last"):
    if data_format == "channels_last":
        return layernorm_channels_last(x, weight, bias, eps)
    elif data_format == "channels_first":
        return layernorm_channels_first(x, weight, bias, eps)
    raise NotImplementedError(data_format)


if __name__ == "__main__":
    key = jax.random.PRNGKey(0)
    k1, k2, k3 = jax.random.split(key, 3)
    eps = 1e-6

    # channels_first: (B, C, H, W)
    B, C, H, W = 2, 4, 16, 16
    weight = jnp.linspace(0.5, 1.5, C, dtype=jnp.float32)
    bias = jnp.linspace(-0.2, 0.2, C, dtype=jnp.float32)
    x_cf = jax.random.normal(k1, (B, C, H, W), jnp.float32)
    out_cf = layer_norm(x_cf, weight, bias, eps, data_format="channels_first")

    # channels_last with tiny C (exercises the lane-dense folded path)
    x_cl = jax.random.normal(k2, (B, H, W, C), jnp.float32)
    out_cl = layer_norm(x_cl, weight, bias, eps, data_format="channels_last")

    # channels_last with C = 128 (exercises the direct lane-reduce path)
    C2 = 128
    w2 = jnp.linspace(0.8, 1.2, C2, dtype=jnp.float32)
    b2 = jnp.linspace(-0.1, 0.1, C2, dtype=jnp.float32)
    x_cl2 = jax.random.normal(k3, (2, 8, 8, C2), jnp.float32)
    out_cl2 = layer_norm(x_cl2, w2, b2, eps, data_format="channels_last")

    # bf16 in -> bf16 out (native-dtype I/O path)
    x_bf = x_cl.astype(jnp.bfloat16)
    w_bf = weight.astype(jnp.bfloat16)
    b_bf = bias.astype(jnp.bfloat16)
    out_bf = layer_norm(x_bf, w_bf, b_bf, eps, data_format="channels_last")

    jax.block_until_ready((out_cf, out_cl, out_cl2, out_bf))

    # Pure-JAX references (same math as the PyTorch module).
    def ref_cf_fn(x, w, b):
        u = jnp.mean(x, axis=1, keepdims=True)
        s = jnp.mean((x - u) ** 2, axis=1, keepdims=True)
        return (w[None, :, None, None] * (x - u) / jnp.sqrt(s + eps)
                + b[None, :, None, None])

    def ref_cl_fn(x, w, b):
        u = jnp.mean(x, axis=-1, keepdims=True)
        s = jnp.mean((x - u) ** 2, axis=-1, keepdims=True)
        return (x - u) / jnp.sqrt(s + eps) * w + b

    ref_cf = ref_cf_fn(x_cf, weight, bias)
    ref_cl = ref_cl_fn(x_cl, weight, bias)
    ref_cl2 = ref_cl_fn(x_cl2, w2, b2)
    ref_bf = ref_cl_fn(x_bf.astype(jnp.float32), w_bf.astype(jnp.float32),
                       b_bf.astype(jnp.float32))

    assert out_cf.shape == x_cf.shape and out_cf.dtype == x_cf.dtype
    assert out_cl.shape == x_cl.shape and out_cl.dtype == x_cl.dtype
    assert out_cl2.shape == x_cl2.shape and out_cl2.dtype == x_cl2.dtype
    assert out_bf.shape == x_bf.shape and out_bf.dtype == jnp.bfloat16

    assert jnp.allclose(out_cf, ref_cf, atol=1e-4, rtol=1e-4)
    assert jnp.allclose(out_cl, ref_cl, atol=1e-4, rtol=1e-4)
    assert jnp.allclose(out_cl2, ref_cl2, atol=1e-4, rtol=1e-4)
    assert jnp.allclose(out_bf.astype(jnp.float32), ref_bf, atol=5e-2, rtol=5e-2)

    print("KERNEL_OK")
</pallas_src>

<mosaic_0001>
module attributes {stable_mosaic.version = 11 : i64} {
  func.func @_ln_cf_kernel(%arg0: i32, %arg1: i32, %arg2: memref<1x4x256xf32, #tpu.memory_space<vmem>>, %arg3: memref<4x1xf32, #tpu.memory_space<vmem>>, %arg4: memref<4x1xf32, #tpu.memory_space<vmem>>, %arg5: memref<1x4x256xf32, #tpu.memory_space<vmem>>) attributes {dimension_semantics = [#tpu.dimension_semantics<parallel>, #tpu.dimension_semantics<parallel>], iteration_bounds = array<i64: 2, 1>, scalar_prefetch = 0 : i64, scratch_operands = 0 : i64, tpu.core_type = #tpu.core_type<tc>, window_params = [{transform_indices = @transform_0, window_bounds = array<i64: 1, 4, 256>}, {pipeline_mode = #tpu.pipeline_mode<synchronous>, transform_indices = @transform_1, window_bounds = array<i64: 4, 1>}, {pipeline_mode = #tpu.pipeline_mode<synchronous>, transform_indices = @transform_2, window_bounds = array<i64: 4, 1>}, {transform_indices = @transform_3, window_bounds = array<i64: 1, 4, 256>}]} {
    %c0 = arith.constant 0 : index
    %c0_0 = arith.constant 0 : index
    %0 = vector.load %arg3[%c0, %c0_0] : memref<4x1xf32, #tpu.memory_space<vmem>>, vector<4x1xf32>
    %c0_1 = arith.constant 0 : index
    %c0_2 = arith.constant 0 : index
    %1 = vector.load %arg4[%c0_1, %c0_2] : memref<4x1xf32, #tpu.memory_space<vmem>>, vector<4x1xf32>
    %c0_3 = arith.constant 0 : index
    %c0_4 = arith.constant 0 : index
    %c0_5 = arith.constant 0 : index
    %2 = vector.load %arg2[%c0_3, %c0_4, %c0_5] : memref<1x4x256xf32, #tpu.memory_space<vmem>>, vector<1x4x256xf32>
    %3 = vector.shape_cast %2 : vector<1x4x256xf32> to vector<4x256xf32>
    %cst = arith.constant dense<0.000000e+00> : vector<256xf32>
    %4 = vector.multi_reduction <add>, %3, %cst [0] : vector<4x256xf32> to vector<256xf32>
    %5 = vector.shape_cast %4 : vector<256xf32> to vector<1x256xf32>
    %cst_6 = arith.constant 4.000000e+00 : f32
    %6 = vector.broadcast %cst_6 : f32 to vector<1x256xf32>
    %7 = arith.divf %5, %6 : vector<1x256xf32>
    %8 = vector.broadcast %7 : vector<1x256xf32> to vector<4x256xf32>
    %9 = arith.subf %3, %8 : vector<4x256xf32>
    %10 = arith.mulf %9, %9 : vector<4x256xf32>
    %cst_7 = arith.constant dense<0.000000e+00> : vector<256xf32>
    %11 = vector.multi_reduction <add>, %10, %cst_7 [0] : vector<4x256xf32> to vector<256xf32>
    %12 = vector.shape_cast %11 : vector<256xf32> to vector<1x256xf32>
    %cst_8 = arith.constant 4.000000e+00 : f32
    %13 = vector.broadcast %cst_8 : f32 to vector<1x256xf32>
    %14 = arith.divf %12, %13 : vector<1x256xf32>
    %cst_9 = arith.constant 9.99999997E-7 : f32
    %15 = vector.broadcast %cst_9 : f32 to vector<1x256xf32>
    %16 = arith.addf %14, %15 : vector<1x256xf32>
    %17 = math.rsqrt %16 : vector<1x256xf32>
    %18 = vector.broadcast %17 : vector<1x256xf32> to vector<4x256xf32>
    %19 = arith.mulf %9, %18 : vector<4x256xf32>
    %20 = vector.broadcast %0 : vector<4x1xf32> to vector<4x256xf32>
    %21 = arith.mulf %20, %19 : vector<4x256xf32>
    %22 = vector.broadcast %1 : vector<4x1xf32> to vector<4x256xf32>
    %23 = arith.addf %21, %22 : vector<4x256xf32>
    %c0_10 = arith.constant 0 : index
    %c0_11 = arith.constant 0 : index
    %c0_12 = arith.constant 0 : index
    %24 = vector.load %arg5[%c0_10, %c0_11, %c0_12] : memref<1x4x256xf32, #tpu.memory_space<vmem>>, vector<1x4x256xf32>
    %25 = vector.shape_cast %24 : vector<1x4x256xf32> to vector<4x256xf32>
    %26 = vector.shape_cast %23 : vector<4x256xf32> to vector<1x4x256xf32>
    tpu.vector_store %arg5[%c0_10, %c0_11, %c0_12], %26 {strides = array<i32>} : memref<1x4x256xf32, #tpu.memory_space<vmem>>, vector<1x4x256xf32>,
    return
  }
  func.func @transform_0(%arg0: i32, %arg1: i32) -> (i32, i32, i32) {
    %c0_i32 = arith.constant 0 : i32
    %c0_i32_0 = arith.constant 0 : i32
    return %arg0, %c0_i32, %arg1 : i32, i32, i32
  }
  func.func @transform_1(%arg0: i32, %arg1: i32) -> (i32, i32) {
    %c0_i32 = arith.constant 0 : i32
    %c0_i32_0 = arith.constant 0 : i32
    %c0_i32_1 = arith.constant 0 : i32
    return %c0_i32, %c0_i32_0 : i32, i32
  }
  func.func @transform_2(%arg0: i32, %arg1: i32) -> (i32, i32) {
    %c0_i32 = arith.constant 0 : i32
    %c0_i32_0 = arith.constant 0 : i32
    %c0_i32_1 = arith.constant 0 : i32
    return %c0_i32, %c0_i32_0 : i32, i32
  }
  func.func @transform_3(%arg0: i32, %arg1: i32) -> (i32, i32, i32) {
    %c0_i32 = arith.constant 0 : i32
    %c0_i32_0 = arith.constant 0 : i32
    return %arg0, %c0_i32, %arg1 : i32, i32, i32
  }
}

</mosaic_0001>

<llo_original>
// kernel: tpu_custom_call.1
$region0: #{tpu_custom_call.1}
  #allocation0 [shape = 'u32[]', space=smem, size = 0x4, offset = 0x4, fixed_abs, tag = 'smem constant byte address 0x4 - core index']
  #allocation1 [shape = 'u32[144,128]{1,0:T(1,128)}', space=vmem, size = 0x12000, scoped, tag = 'internal scratch']
  %s0 = inlined_call_operand.hbm [shape: f32[2,4,256], index: 0, kind: input, shape index: {}]
  %s1 = inlined_call_operand.vmem [shape: f32[4,1], index: 1, kind: input, shape index: {}]
  %s2 = inlined_call_operand.vmem [shape: f32[4,1], index: 2, kind: input, shape index: {}]
  %s3 = inlined_call_operand.hbm [shape: f32[2,4,256], index: 3, kind: output, shape index: {}]
  %s4 = sld [smem:[#allocation0]]
  $region49: #{tpu_custom_call.1} parent=0
    _
  %s6 = ssub.s32 1, %s4
  %s7 = scalar_select 0, %s6, %s4
  $region1: #{tpu_custom_call.1} parent=0
    #allocation2 [shape = 'u8[8192]{0}', space=vmem, size = 0x2000, scoped, tag = 'input window, operand 0']
    #allocation3 [shape = 's32[2]{0}', space=sflag, size = 0x8, scoped, tag = 'scoped memory for tpu_custom_call.1']
    #allocation4 [shape = 's32[2]{0}', space=sflag, size = 0x8, scoped, tag = 'scoped memory for tpu_custom_call.1']
    #allocation5 [shape = 'u8[8192]{0}', space=vmem, size = 0x2000, scoped, tag = 'output window, operand 0']
    %8 = vsyncpa [#allocation3], 0
    %s9 = scalar_lea.sflag [#allocation3], 1
    %10 = vsyncpa %s9, 0
    %11 = vsyncpa [#allocation4], 0
    %s12 = scalar_lea.sflag [#allocation4], 1
    %13 = vsyncpa %s12, 0
    loop: start=0, step=1, limit=4
    $region2: #{tpu_custom_call.1} parent=1 // loop_pre_header
      _
    $region3: #{tpu_custom_call.1} parent=1 // loop_header
      %s15 = sphi 0, %s19
      %p16 = scmp.ge.s32.totalorder %s15, 4
      %s22 = sphi 0, %s34
      %s23 = sphi 0, %s30
      %s24 = sphi 0, %s22
      %s25 = sphi 0, %s23
      %s26 = sphi 0, %s24
      %s27 = sphi 0, %s25
      %s39 = sphi 0, %s41
      %s42 = sphi 0, %s39
      %s43 = sphi 0, %s42
      %s59 = sphi 0, %s43
      %s63 = sphi 0, %s63
      %s65 = sphi 0, %s63
      %s66 = sphi 0, %s65
      %s80 = sphi 0, %s66
      %s84 = sphi 0, %s84
      %s86 = sphi 0, %s84
      %s87 = sphi 0, %s86
      %s101 = sphi 0, %s87
      %s109 = sphi 0, %s111
      %s112 = sphi 0, %s109
      %s113 = sphi 0, %s112
      %s129 = sphi 0, %s113
    $region4: #{tpu_custom_call.1} parent=1 // loop_header_branch
      %18 = sbr.rel (%p16) target = $region8
    $region5: #{tpu_custom_call.1} parent=1 // loop_body
      %s20 = ssub.s32 %s15, 1
      %s21 = ssub.s32 %s15, 2
      %s28 = sadd.s32 1, %s23
      %p29 = scmp.ge.s32.totalorder %s28, 1
      %s30 = scalar_select %p29, 0, %s28
      %s31 = sadd.s32 1, %s22
      %s32 = scalar_select %p29, %s31, %s22
      %p33 = scmp.ge.s32.totalorder %s32, 2
      %s34 = scalar_select %p33, 0, %s32
      %s35 = ssub.s32 %s22, %s34
      %s36 = ssub.s32 %s23, %s30
      %s37 = sor.u32 %s35, %s36
      %p38 = scmp.eq.s32.totalorder %s37, 0
      %s40 = sadd.s32 %s39, 1
      %s41 = scalar_select %p38, %s39, %s40
      %p44 = pneg %p38
      %p45 = scmp.eq.s32.totalorder %s15, 1
      %p46 = por %p44, %p45
      %p47 = scmp.ne.s32.totalorder %s39, %s42
      %p48 = scmp.eq.s32.totalorder %s15, 0
      %p49 = por %p47, %p48
      %p50 = scmp.ne.s32.totalorder %s39, %s42
      %p51 = scmp.eq.s32.totalorder %s20, 1
      %p52 = por %p50, %p51
      %p53 = scmp.ne.s32.totalorder %s42, %s43
      %p54 = scmp.eq.s32.totalorder %s20, 0
      %p55 = por %p53, %p54
      %p56 = scmp.ne.s32.totalorder %s42, %s43
      %p57 = scmp.eq.s32.totalorder %s21, 1
      %p58 = por %p56, %p57
      %p60 = scmp.ne.s32.totalorder %s43, %s59
      %p61 = scmp.eq.s32.totalorder %s21, 0
      %p62 = por %p60, %p61
      %s64 = sadd.s32 %s63, 1
      %p67 = scmp.eq.s32.totalorder %s15, 1
      %p68 = scmp.ne.s32.totalorder %s63, %s65
      %p69 = scmp.eq.s32.totalorder %s15, 0
      %p70 = por %p68, %p69
      %p71 = scmp.ne.s32.totalorder %s63, %s65
      %p72 = scmp.eq.s32.totalorder %s20, 1
      %p73 = por %p71, %p72
      %p74 = scmp.ne.s32.totalorder %s65, %s66
      %p75 = scmp.eq.s32.totalorder %s20, 0
      %p76 = por %p74, %p75
      %p77 = scmp.ne.s32.totalorder %s65, %s66
      %p78 = scmp.eq.s32.totalorder %s21, 1
      %p79 = por %p77, %p78
      %p81 = scmp.ne.s32.totalorder %s66, %s80
      %p82 = scmp.eq.s32.totalorder %s21, 0
      %p83 = por %p81, %p82
      %s85 = sadd.s32 %s84, 1
      %p88 = scmp.eq.s32.totalorder %s15, 1
      %p89 = scmp.ne.s32.totalorder %s84, %s86
      %p90 = scmp.eq.s32.totalorder %s15, 0
      %p91 = por %p89, %p90
      %p92 = scmp.ne.s32.totalorder %s84, %s86
      %p93 = scmp.eq.s32.totalorder %s20, 1
      %p94 = por %p92, %p93
      %p95 = scmp.ne.s32.totalorder %s86, %s87
      %p96 = scmp.eq.s32.totalorder %s20, 0
      %p97 = por %p95, %p96
      %p98 = scmp.ne.s32.totalorder %s86, %s87
      %p99 = scmp.eq.s32.totalorder %s21, 1
      %p100 = por %p98, %p99
      %p102 = scmp.ne.s32.totalorder %s87, %s101
      %p103 = scmp.eq.s32.totalorder %s21, 0
      %p104 = por %p102, %p103
      %s105 = ssub.s32 %s22, %s34
      %s106 = ssub.s32 %s23, %s30
      %s107 = sor.u32 %s105, %s106
      %p108 = scmp.eq.s32.totalorder %s107, 0
      %s110 = sadd.s32 %s109, 1
      %s111 = scalar_select %p108, %s109, %s110
      %p114 = pneg %p108
      %p115 = scmp.eq.s32.totalorder %s15, 1
      %p116 = por %p114, %p115
      %p117 = scmp.ne.s32.totalorder %s109, %s112
      %p118 = scmp.eq.s32.totalorder %s15, 0
      %p119 = por %p117, %p118
      %p120 = scmp.ne.s32.totalorder %s109, %s112
      %p121 = scmp.eq.s32.totalorder %s20, 1
      %p122 = por %p120, %p121
      %p123 = scmp.ne.s32.totalorder %s112, %s113
      %p124 = scmp.eq.s32.totalorder %s20, 0
      %p125 = por %p123, %p124
      %p126 = scmp.ne.s32.totalorder %s112, %s113
      %p127 = scmp.eq.s32.totalorder %s21, 1
      %p128 = por %p126, %p127
      %p130 = scmp.ne.s32.totalorder %s113, %s129
      %p131 = scmp.eq.s32.totalorder %s21, 0
      %p132 = por %p130, %p131
      %p133 = scmp.le.s32.totalorder 1, %s15
      %p134 = scmp.lt.s32.totalorder %s15, 3
      %p135 = pnand %p133, %p134
      %p136 = pneg %p135
      // Predicated region
      $region9: #{tpu_custom_call.1} parent=5 // pred_check
        _
      $region10: #{tpu_custom_call.1} parent=5 // pred_check_branch
        %138 = sbr.rel (%p135) target = $region12
      $region11: #{tpu_custom_call.1} parent=5 // pred_region
        %s139 = ssub.s32 %s15, 1
        // Predicated region
        $region13: #{tpu_custom_call.1} parent=11 // pred_check
          %p140 = pneg %p76
        $region14: #{tpu_custom_call.1} parent=11 // pred_check_branch
          %142 = sbr.rel (%p140) target = $region16
        $region15: #{tpu_custom_call.1} parent=11 // pred_region
          _
        $region16: #{tpu_custom_call.1} parent=11 // pred_fallthru
          _
        // Predicated region
        $region17: #{tpu_custom_call.1} parent=11 // pred_check
          %p143 = pneg %p97
        $region18: #{tpu_custom_call.1} parent=11 // pred_check_branch
          %145 = sbr.rel (%p143) target = $region20
        $region19: #{tpu_custom_call.1} parent=11 // pred_region
          _
        $region20: #{tpu_custom_call.1} parent=11 // pred_fallthru
          _
      $region12: #{tpu_custom_call.1} parent=5 // pred_fallthru
        _
      %p146 = scmp.lt.s32.totalorder %s15, 2
      // Predicated region
      $region21: #{tpu_custom_call.1} parent=5 // pred_check
        %p147 = pneg %p146
      $region22: #{tpu_custom_call.1} parent=5 // pred_check_branch
        %149 = sbr.rel (%p147) target = $region24
      $region23: #{tpu_custom_call.1} parent=5 // pred_region
        // Predicated region
        $region25: #{tpu_custom_call.1} parent=23 // pred_check
          %p150 = pneg %p49
        $region26: #{tpu_custom_call.1} parent=23 // pred_check_branch
          %152 = sbr.rel (%p150) target = $region28
        $region27: #{tpu_custom_call.1} parent=23 // pred_region
          %s153 = sand.u32 %s39, 1
          %s154 = scalar_lea.sflag [#allocation3], %s153
          %s155 = sand.u32 %s39, 1
          %s156 = smul.addr %s155, 8
          %s157 = scalar_lea.vmem [#allocation2], %s156
          %s158 = smul.u32 2, %s23
          %s160 = ssub.s32 128, 128
          %161 = vsyncadd %s154, %s160
          %s162 = smul.addr %s22, 2
          %s163 = sadd.s32 %s158, %s162
          %s164 = smul.addr %s163, 64
          %s165 = scalar_lea.hbm %s0, %s164
          %s167 = sshll.u32 %s157, 4
          %s168 = int_to_ptr.vmem [resolvable:$true] %s167
          %170 = dma.hbm_to_vmem [thread:$0]  %s165, 128, %s168, %s154
        $region28: #{tpu_custom_call.1} parent=23 // pred_fallthru
          _
      $region24: #{tpu_custom_call.1} parent=5 // pred_fallthru
        _
      %p171 = scmp.le.s32.totalorder 1, %s15
      %p172 = scmp.lt.s32.totalorder %s15, 3
      %p173 = pnand %p171, %p172
      %p174 = pneg %p173
      // Predicated region
      $region29: #{tpu_custom_call.1} parent=5 // pred_check
        _
      $region30: #{tpu_custom_call.1} parent=5 // pred_check_branch
        %176 = sbr.rel (%p173) target = $region32
      $region31: #{tpu_custom_call.1} parent=5 // pred_region
        %s177 = ssub.s32 %s15, 1
        %s178 = sand.u32 %s42, 1
        %s179 = scalar_lea.sflag [#allocation3], %s178
        %s180 = sand.u32 %s42, 1
        %s181 = smul.addr %s180, 8
        %s182 = scalar_lea.vmem [#allocation2], %s181
        // Predicated region
        $region33: #{tpu_custom_call.1} parent=31 // pred_check
          %p183 = pneg %p55
        $region34: #{tpu_custom_call.1} parent=31 // pred_check_branch
          %185 = sbr.rel (%p183) target = $region36
        $region35: #{tpu_custom_call.1} parent=31 // pred_region
          %186 = dma.done %s179, 128
        $region36: #{tpu_custom_call.1} parent=31 // pred_fallthru
          _
        %s187 = sand.u32 %s42, 1
        %s188 = scalar_lea.sflag [#allocation3], %s187
        %s189 = sand.u32 %s42, 1
        %s190 = smul.addr %s189, 8
        %s191 = scalar_lea.vmem [#allocation2], %s190
        %p192 = pneg %p55
        %p193 = pneg %p52
        %p194 = pneg %p76
        %p195 = pneg %p73
        %p196 = pneg %p97
        %p197 = pneg %p94
        %p198 = pneg %p125
        %p199 = pneg %p122
        %s200 = sand.u32 %s112, 1
        %s201 = scalar_lea.sflag [#allocation4], %s200
        %s202 = sand.u32 %s112, 1
        %s203 = smul.addr %s202, 8
        %s204 = scalar_lea.vmem [#allocation5], %s203
        %s205 = smul.u32 2, %s25
        %s206 = smul.u32 2, %s25
        %v207 = vld [vmem:[%s1] sm:$0xf]
        %v208 = vld [vmem:[%s2] sm:$0xf]
        %v209 = vld [vmem:[%s182] sm:$0xff]
        %v211 = vcombine.high %v209, %v209
        %vm213 = vcmask 1043456
        %v214 = vsel %vm213, %v209, 0.0
        %v215 = vrot.slane %v214, 4
        %v216 = vadd.f32 %v214, %v215
        %v217 = vrot.slane %v216, 2
        %v218 = vadd.f32 %v216, %v217
        %v219 = vrot.slane %v218, 1
        %v220 = vadd.f32 %v218, %v219
        %v221 = vsel %vm213, %v211, 0.0
        %v222 = vrot.slane %v221, 4
        %v223 = vadd.f32 %v221, %v222
        %v224 = vrot.slane %v223, 2
        %v225 = vadd.f32 %v223, %v224
        %v226 = vrot.slane %v225, 1
        %v227 = vadd.f32 %v225, %v226
        %v228 = vrcp.pop 4.0
        %v229 = vmul.f32 %v220, %v228
        %v230 = vmul.f32 %v227, %v228
        %v233 = vcombine.low %v229, %v230
        %v235 = vsub.f32 %v209, %v233
        %v236 = vmul.f32 %v235, %v235
        %v238 = vcombine.high %v236, %v236
        %v240 = vsel %vm213, %v236, 0.0
        %v241 = vrot.slane %v240, 4
        %v242 = vadd.f32 %v240, %v241
        %v243 = vrot.slane %v242, 2
        %v244 = vadd.f32 %v242, %v243
        %v245 = vrot.slane %v244, 1
        %v246 = vadd.f32 %v244, %v245
        %v247 = vsel %vm213, %v238, 0.0
        %v248 = vrot.slane %v247, 4
        %v249 = vadd.f32 %v247, %v248
        %v250 = vrot.slane %v249, 2
        %v251 = vadd.f32 %v249, %v250
        %v252 = vrot.slane %v251, 1
        %v253 = vadd.f32 %v251, %v252
        %v254 = vmul.f32 %v246, %v228
        %v255 = vmul.f32 %v253, %v228
        %v256 = vadd.f32 %v254, 1e-06
        %v257 = vadd.f32 %v255, 1e-06
        %v258 = vrsqrt.pop %v256
        %v259 = vrsqrt.pop %v257
        %v262 = vcombine.low %v258, %v259
        %v264 = vmul.f32 %v235, %v262
        %266 = vset.pattern.permute.xlu0 0
        %267 = vperm.xlu0 %266, %v207
        %v268 = vpop.permute.xlu0 %267
        %v271 = vcombine.high %v264, %v264
        %v273 = vmul.f32 %v268, %v264
        %v274 = vmul.f32 %v268, %v271
        %276 = vset.pattern.permute.xlu0 0
        %277 = vperm.xlu0 %276, %v208
        %v278 = vpop.permute.xlu0 %277
        %v280 = vadd.f32 %v273, %v278
        %v281 = vadd.f32 %v274, %v278
        %v284 = vcombine.low %v280, %v281
        %286 = vst [vmem:[%s204] sm:$0xff] %v284
        %s287 = sand.u32 %s112, 1
        %s288 = scalar_lea.sflag [#allocation4], %s287
        %s289 = sand.u32 %s112, 1
        %s290 = smul.addr %s289, 8
        %s291 = scalar_lea.vmem [#allocation5], %s290
        // Predicated region
        $region37: #{tpu_custom_call.1} parent=31 // pred_check
          %p292 = pneg %p122
        $region38: #{tpu_custom_call.1} parent=31 // pred_check_branch
          %294 = sbr.rel (%p292) target = $region40
        $region39: #{tpu_custom_call.1} parent=31 // pred_region
          %s295 = smul.u32 2, %s25
          %s297 = ssub.s32 128, 128
          %298 = vsyncadd %s288, %s297
          %s299 = smul.addr %s24, 2
          %s300 = sadd.s32 %s295, %s299
          %s301 = smul.addr %s300, 64
          %s302 = scalar_lea.hbm %s3, %s301
          %s304 = sshll.u32 %s291, 4
          %s305 = int_to_ptr.vmem [resolvable:$true] %s304
          %307 = dma.vmem_to_hbm [thread:$0]  %s305, 128, %s302, %s288
        $region40: #{tpu_custom_call.1} parent=31 // pred_fallthru
          _
      $region32: #{tpu_custom_call.1} parent=5 // pred_fallthru
        _
      %p308 = scmp.le.s32.totalorder 2, %s15
      // Predicated region
      $region41: #{tpu_custom_call.1} parent=5 // pred_check
        %p309 = pneg %p308
      $region42: #{tpu_custom_call.1} parent=5 // pred_check_branch
        %311 = sbr.rel (%p309) target = $region44
      $region43: #{tpu_custom_call.1} parent=5 // pred_region
        %s312 = ssub.s32 %s15, 2
        // Predicated region
        $region45: #{tpu_custom_call.1} parent=43 // pred_check
          %p313 = pneg %p128
        $region46: #{tpu_custom_call.1} parent=43 // pred_check_branch
          %315 = sbr.rel (%p313) target = $region48
        $region47: #{tpu_custom_call.1} parent=43 // pred_region
          %s316 = sand.u32 %s113, 1
          %s317 = scalar_lea.sflag [#allocation4], %s316
          %s318 = sand.u32 %s113, 1
          %s319 = smul.addr %s318, 8
          %s320 = scalar_lea.vmem [#allocation5], %s319
          %321 = dma.done %s317, 128
        $region48: #{tpu_custom_call.1} parent=43 // pred_fallthru
          _
      $region44: #{tpu_custom_call.1} parent=5 // pred_fallthru
        _
    $region6: #{tpu_custom_call.1} parent=1 // loop_footer
      %s19 = sadd.s32 1, %s15
    $region7: #{tpu_custom_call.1} parent=1 // loop_footer_branch
      %14 = sbr.rel target = $region3
    $region8: #{tpu_custom_call.1} parent=1 // loop_exit
      _
    %322 = vsyncpa [#allocation3], 1
    %s323 = scalar_lea.sflag [#allocation3], 1
    %324 = vsyncpa %s323, 1
    %325 = vsyncpa [#allocation4], 1
    %s326 = scalar_lea.sflag [#allocation4], 1
    %327 = vsyncpa %s326, 1

</llo_original>
